<compile_context>
chip_gen: v6e
topology: v6e:2x2x1
jax: 0.10.0
libtpu: 0.0.40
codegen_flags: <defaults>
</compile_context>

<pallas_src>
import functools

import numpy as np
import jax
import jax.numpy as jnp
from jax.experimental import pallas as pl
from jax.experimental.pallas import tpu as pltpu

# Conservative fused-path VMEM budget that fits the scoped default on all of
# v5e / v6e / v7x (v7x has only 64 MiB physical, 32 MiB scoped default).
_FUSED_K_VMEM_BUDGET_BYTES = 24 * 1024 * 1024


# ----------------------------------------------------------------------------
# Host-side (NumPy) weight construction, cached so it is computed exactly once
# per shape/dtype and never re-emitted as device ops.
# ----------------------------------------------------------------------------
def _bilinear_weight_matrix_np(out_size: int, in_size: int) -> np.ndarray:
    """Interpolation matrix W (out_size, in_size), align_corners=False."""
    scale = in_size / out_size
    dst = np.arange(out_size, dtype=np.float64)
    src = np.maximum((dst + 0.5) * scale - 0.5, 0.0)  # PyTorch clamps src >= 0
    i0 = np.clip(np.floor(src).astype(np.int64), 0, in_size - 1)
    i1 = np.minimum(i0 + 1, in_size - 1)
    w1 = src - i0
    w0 = 1.0 - w1
    w = np.zeros((out_size, in_size), dtype=np.float64)
    w[np.arange(out_size), i0] += w0
    w[np.arange(out_size), i1] += w1
    return w.astype(np.float32)


@functools.lru_cache(maxsize=32)
def _fused_resize_weight(h_in, w_in, h_out, w_out, weight_dtype_name):
    """K^T with K[(o,p),(h,w)] = Wh[o,h] * Ww[p,w]; shape (H_in*W_in, H_out*W_out)."""
    wh = _bilinear_weight_matrix_np(h_out, h_in)
    ww = _bilinear_weight_matrix_np(w_out, w_in)
    kt = np.einsum("oh,pw->hwop", wh, ww).reshape(h_in * w_in, h_out * w_out)
    return jnp.asarray(kt, dtype=jnp.dtype(weight_dtype_name))


@functools.lru_cache(maxsize=32)
def _separable_resize_weights(h_in, w_in, h_out, w_out, weight_dtype_name):
    dt = jnp.dtype(weight_dtype_name)
    wh = jnp.asarray(_bilinear_weight_matrix_np(h_out, h_in), dtype=dt)
    ww = jnp.asarray(_bilinear_weight_matrix_np(w_out, w_in), dtype=dt)
    return wh, ww


def _largest_divisor_leq(n: int, cap: int) -> int:
    for d in range(min(n, cap), 0, -1):
        if n % d == 0:
            return d
    return 1


# ----------------------------------------------------------------------------
# Kernels
# ----------------------------------------------------------------------------
def _fused_resize_kernel(x_ref, kt_ref, o_ref):
    # x_ref:  (M, H_in*W_in)            flattened image planes (lane-dense)
    # kt_ref: (H_in*W_in, H_out*W_out)  fused (Wh ⊗ Ww)^T bilinear weights
    # o_ref:  (M, H_out*W_out)          flattened resized planes (lane-dense)
    o_ref[...] = jnp.dot(
        x_ref[...], kt_ref[...], preferred_element_type=jnp.float32
    ).astype(o_ref.dtype)


def _separable_resize_kernel(x_ref, wh_ref, ww_ref, o_ref):
    # x_ref: (bp, H_in, W_in); wh_ref: (H_out, H_in); ww_ref: (W_out, W_in)
    # o_ref: (bp, H_out, W_out)
    x = x_ref[...]
    ww = ww_ref[...]
    wh = wh_ref[...]
    tmp = jnp.einsum("bhw,pw->bhp", x, ww, preferred_element_type=jnp.float32)
    out = jnp.einsum("oh,bhp->bop", wh, tmp, preferred_element_type=jnp.float32)
    o_ref[...] = out.astype(o_ref.dtype)


# ----------------------------------------------------------------------------
# Wrapper: Transforms(test=True).forward(x)  ==  bilinear resize + squeeze
# ----------------------------------------------------------------------------
def transforms_forward(
    x: jnp.ndarray,
    image_size=(32, 32),
    *,
    weight_dtype=jnp.bfloat16,
    force_separable: bool = False,
    vmem_budget_bytes: int = _FUSED_K_VMEM_BUDGET_BYTES,
) -> jnp.ndarray:
    n, c, h_in, w_in = x.shape
    h_out, w_out = image_size
    nplanes = n * c

    x_itemsize = jnp.dtype(x.dtype).itemsize
    w_itemsize = jnp.dtype(weight_dtype).itemsize
    wname = jnp.dtype(weight_dtype).name

    # --- Fused-K path sizing ------------------------------------------------
    k_bytes = (h_in * w_in) * (h_out * w_out) * w_itemsize
    if nplanes >= 256 and nplanes % 128 == 0:
        # Grid over N*C (parallel -> uses both v7x TensorCores); weight stays
        # resident (index_map returns the same block every step).
        bm = 256 if nplanes % 256 == 0 else 128
        grid = (nplanes // bm,)
    else:
        bm = nplanes
        grid = ()
    fused_vmem = k_bytes + 2 * bm * (h_in * w_in * x_itemsize + h_out * w_out * x_itemsize)
    use_fused = (not force_separable) and (fused_vmem <= vmem_budget_bytes)

    if use_fused:
        kt = _fused_resize_weight(h_in, w_in, h_out, w_out, wname)
        x_flat = x.reshape(nplanes, h_in * w_in)  # contiguous flatten, no transpose
        cost = pl.CostEstimate(
            flops=2 * nplanes * (h_in * w_in) * (h_out * w_out),
            transcendentals=0,
            bytes_accessed=int(
                nplanes * h_in * w_in * x_itemsize
                + k_bytes
                + nplanes * h_out * w_out * x_itemsize
            ),
        )
        if grid == ():
            # Single grid step: whole problem in VMEM, one lane-dense MXU matmul.
            out_flat = pl.pallas_call(
                _fused_resize_kernel,
                out_shape=jax.ShapeDtypeStruct((nplanes, h_out * w_out), x.dtype),
                in_specs=[
                    pl.BlockSpec(memory_space=pltpu.MemorySpace.VMEM),
                    pl.BlockSpec(memory_space=pltpu.MemorySpace.VMEM),
                ],
                out_specs=pl.BlockSpec(memory_space=pltpu.MemorySpace.VMEM),
                cost_estimate=cost,
            )(x_flat, kt)
        else:
            out_flat = pl.pallas_call(
                _fused_resize_kernel,
                out_shape=jax.ShapeDtypeStruct((nplanes, h_out * w_out), x.dtype),
                grid_spec=pltpu.PrefetchScalarGridSpec(
                    num_scalar_prefetch=0,
                    grid=grid,
                    in_specs=[
                        pl.BlockSpec((bm, h_in * w_in), lambda i: (i, 0)),
                        pl.BlockSpec((h_in * w_in, h_out * w_out), lambda i: (0, 0)),
                    ],
                    out_specs=pl.BlockSpec((bm, h_out * w_out), lambda i: (i, 0)),
                ),
                compiler_params=pltpu.CompilerParams(
                    dimension_semantics=("parallel",)
                ),
                cost_estimate=cost,
            )(x_flat, kt)
        resized = out_flat.reshape(n, c, h_out, w_out)
    else:
        # --- Separable fallback: y = Wh @ x @ Ww^T per plane -----------------
        # Used when the fused Kronecker weight would not fit the VMEM budget
        # (large spatial sizes; trips first on v7x's smaller VMEM).
        wh, ww = _separable_resize_weights(h_in, w_in, h_out, w_out, wname)
        x_planes = x.reshape(nplanes, h_in, w_in)
        bp = _largest_divisor_leq(nplanes, 128)
        grid = (nplanes // bp,)
        cost = pl.CostEstimate(
            flops=2 * nplanes * (h_in * w_in * w_out + h_in * w_out * h_out),
            transcendentals=0,
            bytes_accessed=int(
                nplanes * h_in * w_in * x_itemsize
                + (h_out * h_in + w_out * w_in) * w_itemsize
                + nplanes * h_out * w_out * x_itemsize
            ),
        )
        out_planes = pl.pallas_call(
            _separable_resize_kernel,
            out_shape=jax.ShapeDtypeStruct((nplanes, h_out, w_out), x.dtype),
            grid_spec=pltpu.PrefetchScalarGridSpec(
                num_scalar_prefetch=0,
                grid=grid,
                in_specs=[
                    pl.BlockSpec((bp, h_in, w_in), lambda i: (i, 0, 0)),
                    pl.BlockSpec((h_out, h_in), lambda i: (0, 0)),
                    pl.BlockSpec((w_out, w_in), lambda i: (0, 0)),
                ],
                out_specs=pl.BlockSpec((bp, h_out, w_out), lambda i: (i, 0, 0)),
            ),
            compiler_params=pltpu.CompilerParams(dimension_semantics=("parallel",)),
            cost_estimate=cost,
        )(x_planes, wh, ww)
        resized = out_planes.reshape(n, c, h_out, w_out)

    # `.squeeze()` like the PyTorch module (drops all size-1 dims).
    return jnp.squeeze(resized)


if __name__ == "__main__":
    key = jax.random.PRNGKey(0)
    x = jax.random.normal(key, (2, 4, 16, 16), dtype=jnp.float32)
    image_size = (32, 32)

    # f32 reference built from the same NumPy interpolation matrices
    # (validates the Pallas matmul plumbing; PyTorch parity relies on the
    # align_corners=False bilinear weight construction).
    wh_ref = jnp.asarray(_bilinear_weight_matrix_np(image_size[0], x.shape[2]))
    ww_ref = jnp.asarray(_bilinear_weight_matrix_np(image_size[1], x.shape[3]))
    ref = jnp.squeeze(jnp.einsum("oi,ncij,pj->ncop", wh_ref, x, ww_ref))

    # 1) Default path: fused Kronecker weight in bf16, f32 accumulation.
    out_bf16 = jax.block_until_ready(transforms_forward(x, image_size))
    assert out_bf16.shape == (2, 4, 32, 32), out_bf16.shape
    assert jnp.allclose(out_bf16, ref, atol=5e-2, rtol=5e-2)

    # 2) f32-weight fused path: tight parity with the f32 reference.
    out_f32 = jax.block_until_ready(
        transforms_forward(x, image_size, weight_dtype=jnp.float32)
    )
    assert jnp.allclose(out_f32, ref, atol=1e-4, rtol=1e-4)

    # 3) Separable two-matmul fallback (path taken when fused K won't fit VMEM).
    out_sep = jax.block_until_ready(
        transforms_forward(x, image_size, weight_dtype=jnp.float32, force_separable=True)
    )
    assert jnp.allclose(out_sep, ref, atol=1e-4, rtol=1e-4)

    # 4) Gridded fused path (parallel over N*C) at a realistic plane count.
    xb = jax.random.normal(jax.random.PRNGKey(1), (64, 8, 16, 16), dtype=jnp.float32)
    refb = jnp.einsum("oi,ncij,pj->ncop", wh_ref, xb, ww_ref)
    out_b = jax.block_until_ready(
        transforms_forward(xb, image_size, weight_dtype=jnp.float32)
    )
    assert out_b.shape == (64, 8, 32, 32), out_b.shape
    assert jnp.allclose(out_b, refb, atol=1e-4, rtol=1e-4)

    print("KERNEL_OK")
</pallas_src>

<mosaic_0001>
module attributes {stable_mosaic.version = 11 : i64} {
  func.func @_fused_resize_kernel(%arg0: memref<8x256xf32, #tpu.memory_space<vmem>>, %arg1: memref<256x1024xbf16, #tpu.memory_space<vmem>>, %arg2: memref<8x1024xf32, #tpu.memory_space<vmem>>) attributes {dimension_semantics = [], scalar_prefetch = 0 : i64, scratch_operands = 0 : i64, tpu.core_type = #tpu.core_type<tc>} {
    %c0 = arith.constant 0 : index
    %c0_0 = arith.constant 0 : index
    %0 = vector.load %arg0[%c0, %c0_0] : memref<8x256xf32, #tpu.memory_space<vmem>>, vector<8x256xf32>
    %c0_1 = arith.constant 0 : index
    %c0_2 = arith.constant 0 : index
    %1 = vector.load %arg1[%c0_1, %c0_2] : memref<256x1024xbf16, #tpu.memory_space<vmem>>, vector<256x1024xbf16>
    %cst = arith.constant dense<0.000000e+00> : vector<8x1024xf32>
    %2 = tpu.matmul %0, %1, %cst {dimension_numbers = #tpu.dot_dimension_numbers<[1], [0], [0], [1], [0, 0, 1, 1], [], []>} : vector<8x256xf32>, vector<256x1024xbf16>, vector<8x1024xf32> -> vector<8x1024xf32>
    %c0_3 = arith.constant 0 : index
    %c0_4 = arith.constant 0 : index
    %3 = vector.load %arg2[%c0_3, %c0_4] : memref<8x1024xf32, #tpu.memory_space<vmem>>, vector<8x1024xf32>
    tpu.vector_store %arg2[%c0_3, %c0_4], %2 {strides = array<i32>} : memref<8x1024xf32, #tpu.memory_space<vmem>>, vector<8x1024xf32>,
    return
  }
}

</mosaic_0001>

<llo_original>
// kernel: tpu_custom_call.1
$region0: #{tpu_custom_call.1}
  #allocation0 [shape = 'u32[]', space=smem, size = 0x4, offset = 0x4, fixed_abs, tag = 'smem constant byte address 0x4 - core index']
  #allocation1 [shape = 'u32[144,128]{1,0:T(1,128)}', space=vmem, size = 0x12000, scoped, tag = 'internal scratch']
  %s0 = inlined_call_operand.hbm [shape: f32[8,256], index: 0, kind: input, shape index: {}]
  %s1 = inlined_call_operand.hbm [shape: bf16[256,1024], index: 1, kind: input, shape index: {}]
  %s2 = inlined_call_operand.hbm [shape: f32[8,1024], index: 2, kind: output, shape index: {}]
  %s3 = sld [smem:[#allocation0]]
  $region26: #{tpu_custom_call.1} parent=0
    _
  %s5 = ssub.s32 1, %s3
  %s6 = scalar_select 0, %s5, %s3
  $region1: #{tpu_custom_call.1} parent=0
    #allocation2 [shape = 'u8[8192]{0}', space=vmem, size = 0x2000, scoped, tag = 'input window, operand 0, single buffered']
    #allocation3 [shape = 's32[1]{0}', space=sflag, size = 0x4, scoped, tag = 'scoped memory for tpu_custom_call.1']
    #allocation4 [shape = 's32[1]{0}', space=sflag, size = 0x4, scoped, tag = 'scoped memory for tpu_custom_call.1']
    #allocation5 [shape = 'u8[524288]{0}', space=vmem, size = 0x80000, scoped, tag = 'input window, operand 1, single buffered']
    #allocation6 [shape = 's32[1]{0}', space=sflag, size = 0x4, scoped, tag = 'scoped memory for tpu_custom_call.1']
    #allocation7 [shape = 'u8[32768]{0}', space=vmem, size = 0x8000, scoped, tag = 'output window, operand 0, single buffered']
    %7 = vsyncpa [#allocation3], 0
    %8 = vsyncpa [#allocation6], 0
    %9 = vsyncpa [#allocation4], 0
    // Predicated region
    $region2: #{tpu_custom_call.1} parent=1 // pred_check
      _
    $region3: #{tpu_custom_call.1} parent=1 // pred_check_branch
      %11 = sbr.rel (0) target = $region5
    $region4: #{tpu_custom_call.1} parent=1 // pred_region
      %s13 = ssub.s32 256, 256
      %14 = vsyncadd [#allocation3], %s13
      %s16 = sshll.u32 [#allocation2], 4
      %s17 = int_to_ptr.vmem [resolvable:$true] %s16
      %19 = dma.hbm_to_vmem [thread:$0]  %s0, 256, %s17, [#allocation3]
    $region5: #{tpu_custom_call.1} parent=1 // pred_fallthru
      _
    // Predicated region
    $region6: #{tpu_custom_call.1} parent=1 // pred_check
      _
    $region7: #{tpu_custom_call.1} parent=1 // pred_check_branch
      %21 = sbr.rel (0) target = $region9
    $region8: #{tpu_custom_call.1} parent=1 // pred_region
      %s23 = ssub.s32 16384, 16384
      %24 = vsyncadd [#allocation6], %s23
      %s25 = sshll.u32 [#allocation5], 4
      %s26 = int_to_ptr.vmem [resolvable:$true] %s25
      %31 = dma.hbm_to_vmem [thread:$0]  %s1, 16384, %s26, [#allocation6], 512, 512, 32
    $region9: #{tpu_custom_call.1} parent=1 // pred_fallthru
      _
    // Predicated region
    $region10: #{tpu_custom_call.1} parent=1 // pred_check
      _
    $region11: #{tpu_custom_call.1} parent=1 // pred_check_branch
      %33 = sbr.rel (0) target = $region13
    $region12: #{tpu_custom_call.1} parent=1 // pred_region
      %34 = dma.done [#allocation3], 256
    $region13: #{tpu_custom_call.1} parent=1 // pred_fallthru
      _
    // Predicated region
    $region14: #{tpu_custom_call.1} parent=1 // pred_check
      _
    $region15: #{tpu_custom_call.1} parent=1 // pred_check_branch
      %36 = sbr.rel (0) target = $region17
    $region16: #{tpu_custom_call.1} parent=1 // pred_region
      %37 = dma.done [#allocation6], 16384
    $region17: #{tpu_custom_call.1} parent=1 // pred_fallthru
      _
    %v38 = vld [vmem:[#allocation2] sm:$0xff]
    %v39 = vld [vmem:[#allocation2 + $0x8] sm:$0xff]
    %v40 = vld [vmem:[#allocation5] sm:$0xff]
    %v41 = vld [vmem:[#allocation5 + $0x8] sm:$0xff]
    %v42 = vld [vmem:[#allocation5 + $0x10] sm:$0xff]
    %v43 = vld [vmem:[#allocation5 + $0x18] sm:$0xff]
    %v44 = vld [vmem:[#allocation5 + $0x20] sm:$0xff]
    %v45 = vld [vmem:[#allocation5 + $0x28] sm:$0xff]
    %v46 = vld [vmem:[#allocation5 + $0x30] sm:$0xff]
    %v47 = vld [vmem:[#allocation5 + $0x38] sm:$0xff]
    %v48 = vld [vmem:[#allocation5 + $0x40] sm:$0xff]
    %v49 = vld [vmem:[#allocation5 + $0x48] sm:$0xff]
    %v50 = vld [vmem:[#allocation5 + $0x50] sm:$0xff]
    %v51 = vld [vmem:[#allocation5 + $0x58] sm:$0xff]
    %v52 = vld [vmem:[#allocation5 + $0x60] sm:$0xff]
    %v53 = vld [vmem:[#allocation5 + $0x68] sm:$0xff]
    %v54 = vld [vmem:[#allocation5 + $0x70] sm:$0xff]
    %v55 = vld [vmem:[#allocation5 + $0x78] sm:$0xff]
    %v56 = vld [vmem:[#allocation5 + $0x80] sm:$0xff]
    %v57 = vld [vmem:[#allocation5 + $0x88] sm:$0xff]
    %v58 = vld [vmem:[#allocation5 + $0x90] sm:$0xff]
    %v59 = vld [vmem:[#allocation5 + $0x98] sm:$0xff]
    %v60 = vld [vmem:[#allocation5 + $0xa0] sm:$0xff]
    %v61 = vld [vmem:[#allocation5 + $0xa8] sm:$0xff]
    %v62 = vld [vmem:[#allocation5 + $0xb0] sm:$0xff]
    %v63 = vld [vmem:[#allocation5 + $0xb8] sm:$0xff]
    %v64 = vld [vmem:[#allocation5 + $0xc0] sm:$0xff]
    %v65 = vld [vmem:[#allocation5 + $0xc8] sm:$0xff]
    %v66 = vld [vmem:[#allocation5 + $0xd0] sm:$0xff]
    %v67 = vld [vmem:[#allocation5 + $0xd8] sm:$0xff]
    %v68 = vld [vmem:[#allocation5 + $0xe0] sm:$0xff]
    %v69 = vld [vmem:[#allocation5 + $0xe8] sm:$0xff]
    %v70 = vld [vmem:[#allocation5 + $0xf0] sm:$0xff]
    %v71 = vld [vmem:[#allocation5 + $0xf8] sm:$0xff]
    %v72 = vld [vmem:[#allocation5 + $0x100] sm:$0xff]
    %v73 = vld [vmem:[#allocation5 + $0x108] sm:$0xff]
    %v74 = vld [vmem:[#allocation5 + $0x110] sm:$0xff]
    %v75 = vld [vmem:[#allocation5 + $0x118] sm:$0xff]
    %v76 = vld [vmem:[#allocation5 + $0x120] sm:$0xff]
    %v77 = vld [vmem:[#allocation5 + $0x128] sm:$0xff]
    %v78 = vld [vmem:[#allocation5 + $0x130] sm:$0xff]
    %v79 = vld [vmem:[#allocation5 + $0x138] sm:$0xff]
    %v80 = vld [vmem:[#allocation5 + $0x140] sm:$0xff]
    %v81 = vld [vmem:[#allocation5 + $0x148] sm:$0xff]
    %v82 = vld [vmem:[#allocation5 + $0x150] sm:$0xff]
    %v83 = vld [vmem:[#allocation5 + $0x158] sm:$0xff]
    %v84 = vld [vmem:[#allocation5 + $0x160] sm:$0xff]
    %v85 = vld [vmem:[#allocation5 + $0x168] sm:$0xff]
    %v86 = vld [vmem:[#allocation5 + $0x170] sm:$0xff]
    %v87 = vld [vmem:[#allocation5 + $0x178] sm:$0xff]
    %v88 = vld [vmem:[#allocation5 + $0x180] sm:$0xff]
    %v89 = vld [vmem:[#allocation5 + $0x188] sm:$0xff]
    %v90 = vld [vmem:[#allocation5 + $0x190] sm:$0xff]
    %v91 = vld [vmem:[#allocation5 + $0x198] sm:$0xff]
    %v92 = vld [vmem:[#allocation5 + $0x1a0] sm:$0xff]
    %v93 = vld [vmem:[#allocation5 + $0x1a8] sm:$0xff]
    %v94 = vld [vmem:[#allocation5 + $0x1b0] sm:$0xff]
    %v95 = vld [vmem:[#allocation5 + $0x1b8] sm:$0xff]
    %v96 = vld [vmem:[#allocation5 + $0x1c0] sm:$0xff]
    %v97 = vld [vmem:[#allocation5 + $0x1c8] sm:$0xff]
    %v98 = vld [vmem:[#allocation5 + $0x1d0] sm:$0xff]
    %v99 = vld [vmem:[#allocation5 + $0x1d8] sm:$0xff]
    %v100 = vld [vmem:[#allocation5 + $0x1e0] sm:$0xff]
    %v101 = vld [vmem:[#allocation5 + $0x1e8] sm:$0xff]
    %v102 = vld [vmem:[#allocation5 + $0x1f0] sm:$0xff]
    %v103 = vld [vmem:[#allocation5 + $0x1f8] sm:$0xff]
    %v104 = vld [vmem:[#allocation5 + $0x200] sm:$0xff]
    %v105 = vld [vmem:[#allocation5 + $0x208] sm:$0xff]
    %v106 = vld [vmem:[#allocation5 + $0x210] sm:$0xff]
    %v107 = vld [vmem:[#allocation5 + $0x218] sm:$0xff]
    %v108 = vld [vmem:[#allocation5 + $0x220] sm:$0xff]
    %v109 = vld [vmem:[#allocation5 + $0x228] sm:$0xff]
    %v110 = vld [vmem:[#allocation5 + $0x230] sm:$0xff]
    %v111 = vld [vmem:[#allocation5 + $0x238] sm:$0xff]
    %v112 = vld [vmem:[#allocation5 + $0x240] sm:$0xff]
    %v113 = vld [vmem:[#allocation5 + $0x248] sm:$0xff]
    %v114 = vld [vmem:[#allocation5 + $0x250] sm:$0xff]
    %v115 = vld [vmem:[#allocation5 + $0x258] sm:$0xff]
    %v116 = vld [vmem:[#allocation5 + $0x260] sm:$0xff]
    %v117 = vld [vmem:[#allocation5 + $0x268] sm:$0xff]
    %v118 = vld [vmem:[#allocation5 + $0x270] sm:$0xff]
    %v119 = vld [vmem:[#allocation5 + $0x278] sm:$0xff]
    %v120 = vld [vmem:[#allocation5 + $0x280] sm:$0xff]
    %v121 = vld [vmem:[#allocation5 + $0x288] sm:$0xff]
    %v122 = vld [vmem:[#allocation5 + $0x290] sm:$0xff]
    %v123 = vld [vmem:[#allocation5 + $0x298] sm:$0xff]
    %v124 = vld [vmem:[#allocation5 + $0x2a0] sm:$0xff]
    %v125 = vld [vmem:[#allocation5 + $0x2a8] sm:$0xff]
    %v126 = vld [vmem:[#allocation5 + $0x2b0] sm:$0xff]
    %v127 = vld [vmem:[#allocation5 + $0x2b8] sm:$0xff]
    %v128 = vld [vmem:[#allocation5 + $0x2c0] sm:$0xff]
    %v129 = vld [vmem:[#allocation5 + $0x2c8] sm:$0xff]
    %v130 = vld [vmem:[#allocation5 + $0x2d0] sm:$0xff]
    %v131 = vld [vmem:[#allocation5 + $0x2d8] sm:$0xff]
    %v132 = vld [vmem:[#allocation5 + $0x2e0] sm:$0xff]
    %v133 = vld [vmem:[#allocation5 + $0x2e8] sm:$0xff]
    %v134 = vld [vmem:[#allocation5 + $0x2f0] sm:$0xff]
    %v135 = vld [vmem:[#allocation5 + $0x2f8] sm:$0xff]
    %v136 = vld [vmem:[#allocation5 + $0x300] sm:$0xff]
    %v137 = vld [vmem:[#allocation5 + $0x308] sm:$0xff]
    %v138 = vld [vmem:[#allocation5 + $0x310] sm:$0xff]
    %v139 = vld [vmem:[#allocation5 + $0x318] sm:$0xff]
    %v140 = vld [vmem:[#allocation5 + $0x320] sm:$0xff]
    %v141 = vld [vmem:[#allocation5 + $0x328] sm:$0xff]
    %v142 = vld [vmem:[#allocation5 + $0x330] sm:$0xff]
    %v143 = vld [vmem:[#allocation5 + $0x338] sm:$0xff]
    %v144 = vld [vmem:[#allocation5 + $0x340] sm:$0xff]
    %v145 = vld [vmem:[#allocation5 + $0x348] sm:$0xff]
    %v146 = vld [vmem:[#allocation5 + $0x350] sm:$0xff]
    %v147 = vld [vmem:[#allocation5 + $0x358] sm:$0xff]
    %v148 = vld [vmem:[#allocation5 + $0x360] sm:$0xff]
    %v149 = vld [vmem:[#allocation5 + $0x368] sm:$0xff]
    %v150 = vld [vmem:[#allocation5 + $0x370] sm:$0xff]
    %v151 = vld [vmem:[#allocation5 + $0x378] sm:$0xff]
    %v152 = vld [vmem:[#allocation5 + $0x380] sm:$0xff]
    %v153 = vld [vmem:[#allocation5 + $0x388] sm:$0xff]
    %v154 = vld [vmem:[#allocation5 + $0x390] sm:$0xff]
    %v155 = vld [vmem:[#allocation5 + $0x398] sm:$0xff]
    %v156 = vld [vmem:[#allocation5 + $0x3a0] sm:$0xff]
    %v157 = vld [vmem:[#allocation5 + $0x3a8] sm:$0xff]
    %v158 = vld [vmem:[#allocation5 + $0x3b0] sm:$0xff]
    %v159 = vld [vmem:[#allocation5 + $0x3b8] sm:$0xff]
    %v160 = vld [vmem:[#allocation5 + $0x3c0] sm:$0xff]
    %v161 = vld [vmem:[#allocation5 + $0x3c8] sm:$0xff]
    %v162 = vld [vmem:[#allocation5 + $0x3d0] sm:$0xff]
    %v163 = vld [vmem:[#allocation5 + $0x3d8] sm:$0xff]
    %v164 = vld [vmem:[#allocation5 + $0x3e0] sm:$0xff]
    %v165 = vld [vmem:[#allocation5 + $0x3e8] sm:$0xff]
    %v166 = vld [vmem:[#allocation5 + $0x3f0] sm:$0xff]
    %v167 = vld [vmem:[#allocation5 + $0x3f8] sm:$0xff]
    %v296 = vunpack.c.l.b16 %v40
    %v297 = vunpack.c.h.b16 %v40
    %v298 = vunpack.c.l.b16 %v41
    %v299 = vunpack.c.h.b16 %v41
    %v300 = vunpack.c.l.b16 %v42
    %v301 = vunpack.c.h.b16 %v42
    %v302 = vunpack.c.l.b16 %v43
    %v303 = vunpack.c.h.b16 %v43
    %v304 = vunpack.c.l.b16 %v44
    %v305 = vunpack.c.h.b16 %v44
    %v306 = vunpack.c.l.b16 %v45
    %v307 = vunpack.c.h.b16 %v45
    %v308 = vunpack.c.l.b16 %v46
    %v309 = vunpack.c.h.b16 %v46
    %v310 = vunpack.c.l.b16 %v47
    %v311 = vunpack.c.h.b16 %v47
    %v312 = vunpack.c.l.b16 %v48
    %v313 = vunpack.c.h.b16 %v48
    %v314 = vunpack.c.l.b16 %v49
    %v315 = vunpack.c.h.b16 %v49
    %v316 = vunpack.c.l.b16 %v50
    %v317 = vunpack.c.h.b16 %v50
    %v318 = vunpack.c.l.b16 %v51
    %v319 = vunpack.c.h.b16 %v51
    %v320 = vunpack.c.l.b16 %v52
    %v321 = vunpack.c.h.b16 %v52
    %v322 = vunpack.c.l.b16 %v53
    %v323 = vunpack.c.h.b16 %v53
    %v324 = vunpack.c.l.b16 %v54
    %v325 = vunpack.c.h.b16 %v54
    %v326 = vunpack.c.l.b16 %v55
    %v327 = vunpack.c.h.b16 %v55
    %v328 = vunpack.c.l.b16 %v56
    %v329 = vunpack.c.h.b16 %v56
    %v330 = vunpack.c.l.b16 %v57
    %v331 = vunpack.c.h.b16 %v57
    %v332 = vunpack.c.l.b16 %v58
    %v333 = vunpack.c.h.b16 %v58
    %v334 = vunpack.c.l.b16 %v59
    %v335 = vunpack.c.h.b16 %v59
    %v336 = vunpack.c.l.b16 %v60
    %v337 = vunpack.c.h.b16 %v60
    %v338 = vunpack.c.l.b16 %v61
    %v339 = vunpack.c.h.b16 %v61
    %v340 = vunpack.c.l.b16 %v62
    %v341 = vunpack.c.h.b16 %v62
    %v342 = vunpack.c.l.b16 %v63
    %v343 = vunpack.c.h.b16 %v63
    %v344 = vunpack.c.l.b16 %v64
    %v345 = vunpack.c.h.b16 %v64
    %v346 = vunpack.c.l.b16 %v65
    %v347 = vunpack.c.h.b16 %v65
    %v348 = vunpack.c.l.b16 %v66
    %v349 = vunpack.c.h.b16 %v66
    %v350 = vunpack.c.l.b16 %v67
    %v351 = vunpack.c.h.b16 %v67
    %v352 = vunpack.c.l.b16 %v68
    %v353 = vunpack.c.h.b16 %v68
    %v354 = vunpack.c.l.b16 %v69
    %v355 = vunpack.c.h.b16 %v69
    %v356 = vunpack.c.l.b16 %v70
    %v357 = vunpack.c.h.b16 %v70
    %v358 = vunpack.c.l.b16 %v71
    %v359 = vunpack.c.h.b16 %v71
    %v360 = vunpack.c.l.b16 %v72
    %v361 = vunpack.c.h.b16 %v72
    %v362 = vunpack.c.l.b16 %v73
    %v363 = vunpack.c.h.b16 %v73
    %v364 = vunpack.c.l.b16 %v74
    %v365 = vunpack.c.h.b16 %v74
    %v366 = vunpack.c.l.b16 %v75
    %v367 = vunpack.c.h.b16 %v75
    %v368 = vunpack.c.l.b16 %v76
    %v369 = vunpack.c.h.b16 %v76
    %v370 = vunpack.c.l.b16 %v77
    %v371 = vunpack.c.h.b16 %v77
    %v372 = vunpack.c.l.b16 %v78
    %v373 = vunpack.c.h.b16 %v78
    %v374 = vunpack.c.l.b16 %v79
    %v375 = vunpack.c.h.b16 %v79
    %v376 = vunpack.c.l.b16 %v80
    %v377 = vunpack.c.h.b16 %v80
    %v378 = vunpack.c.l.b16 %v81
    %v379 = vunpack.c.h.b16 %v81
    %v380 = vunpack.c.l.b16 %v82
    %v381 = vunpack.c.h.b16 %v82
    %v382 = vunpack.c.l.b16 %v83
    %v383 = vunpack.c.h.b16 %v83
    %v384 = vunpack.c.l.b16 %v84
    %v385 = vunpack.c.h.b16 %v84
    %v386 = vunpack.c.l.b16 %v85
    %v387 = vunpack.c.h.b16 %v85
    %v388 = vunpack.c.l.b16 %v86
    %v389 = vunpack.c.h.b16 %v86
    %v390 = vunpack.c.l.b16 %v87
    %v391 = vunpack.c.h.b16 %v87
    %v392 = vunpack.c.l.b16 %v88
    %v393 = vunpack.c.h.b16 %v88
    %v394 = vunpack.c.l.b16 %v89
    %v395 = vunpack.c.h.b16 %v89
    %v396 = vunpack.c.l.b16 %v90
    %v397 = vunpack.c.h.b16 %v90
    %v398 = vunpack.c.l.b16 %v91
    %v399 = vunpack.c.h.b16 %v91
    %v400 = vunpack.c.l.b16 %v92
    %v401 = vunpack.c.h.b16 %v92
    %v402 = vunpack.c.l.b16 %v93
    %v403 = vunpack.c.h.b16 %v93
    %v404 = vunpack.c.l.b16 %v94
    %v405 = vunpack.c.h.b16 %v94
    %v406 = vunpack.c.l.b16 %v95
    %v407 = vunpack.c.h.b16 %v95
    %v408 = vunpack.c.l.b16 %v96
    %v409 = vunpack.c.h.b16 %v96
    %v410 = vunpack.c.l.b16 %v97
    %v411 = vunpack.c.h.b16 %v97
    %v412 = vunpack.c.l.b16 %v98
    %v413 = vunpack.c.h.b16 %v98
    %v414 = vunpack.c.l.b16 %v99
    %v415 = vunpack.c.h.b16 %v99
    %v416 = vunpack.c.l.b16 %v100
    %v417 = vunpack.c.h.b16 %v100
    %v418 = vunpack.c.l.b16 %v101
    %v419 = vunpack.c.h.b16 %v101
    %v420 = vunpack.c.l.b16 %v102
    %v421 = vunpack.c.h.b16 %v102
    %v422 = vunpack.c.l.b16 %v103
    %v423 = vunpack.c.h.b16 %v103
    %v424 = vunpack.c.l.b16 %v104
    %v425 = vunpack.c.h.b16 %v104
    %v426 = vunpack.c.l.b16 %v105
    %v427 = vunpack.c.h.b16 %v105
    %v428 = vunpack.c.l.b16 %v106
    %v429 = vunpack.c.h.b16 %v106
    %v430 = vunpack.c.l.b16 %v107
    %v431 = vunpack.c.h.b16 %v107
    %v432 = vunpack.c.l.b16 %v108
    %v433 = vunpack.c.h.b16 %v108
    %v434 = vunpack.c.l.b16 %v109
    %v435 = vunpack.c.h.b16 %v109
    %v436 = vunpack.c.l.b16 %v110
    %v437 = vunpack.c.h.b16 %v110
    %v438 = vunpack.c.l.b16 %v111
    %v439 = vunpack.c.h.b16 %v111
    %v440 = vunpack.c.l.b16 %v112
    %v441 = vunpack.c.h.b16 %v112
    %v442 = vunpack.c.l.b16 %v113
    %v443 = vunpack.c.h.b16 %v113
    %v444 = vunpack.c.l.b16 %v114
    %v445 = vunpack.c.h.b16 %v114
    %v446 = vunpack.c.l.b16 %v115
    %v447 = vunpack.c.h.b16 %v115
    %v448 = vunpack.c.l.b16 %v116
    %v449 = vunpack.c.h.b16 %v116
    %v450 = vunpack.c.l.b16 %v117
    %v451 = vunpack.c.h.b16 %v117
    %v452 = vunpack.c.l.b16 %v118
    %v453 = vunpack.c.h.b16 %v118
    %v454 = vunpack.c.l.b16 %v119
    %v455 = vunpack.c.h.b16 %v119
    %v456 = vunpack.c.l.b16 %v120
    %v457 = vunpack.c.h.b16 %v120
    %v458 = vunpack.c.l.b16 %v121
    %v459 = vunpack.c.h.b16 %v121
    %v460 = vunpack.c.l.b16 %v122
    %v461 = vunpack.c.h.b16 %v122
    %v462 = vunpack.c.l.b16 %v123
    %v463 = vunpack.c.h.b16 %v123
    %v464 = vunpack.c.l.b16 %v124
    %v465 = vunpack.c.h.b16 %v124
    %v466 = vunpack.c.l.b16 %v125
    %v467 = vunpack.c.h.b16 %v125
    %v468 = vunpack.c.l.b16 %v126
    %v469 = vunpack.c.h.b16 %v126
    %v470 = vunpack.c.l.b16 %v127
    %v471 = vunpack.c.h.b16 %v127
    %v472 = vunpack.c.l.b16 %v128
    %v473 = vunpack.c.h.b16 %v128
    %v474 = vunpack.c.l.b16 %v129
    %v475 = vunpack.c.h.b16 %v129
    %v476 = vunpack.c.l.b16 %v130
    %v477 = vunpack.c.h.b16 %v130
    %v478 = vunpack.c.l.b16 %v131
    %v479 = vunpack.c.h.b16 %v131
    %v480 = vunpack.c.l.b16 %v132
    %v481 = vunpack.c.h.b16 %v132
    %v482 = vunpack.c.l.b16 %v133
    %v483 = vunpack.c.h.b16 %v133
    %v484 = vunpack.c.l.b16 %v134
    %v485 = vunpack.c.h.b16 %v134
    %v486 = vunpack.c.l.b16 %v135
    %v487 = vunpack.c.h.b16 %v135
    %v488 = vunpack.c.l.b16 %v136
    %v489 = vunpack.c.h.b16 %v136
    %v490 = vunpack.c.l.b16 %v137
    %v491 = vunpack.c.h.b16 %v137
    %v492 = vunpack.c.l.b16 %v138
    %v493 = vunpack.c.h.b16 %v138
    %v494 = vunpack.c.l.b16 %v139
    %v495 = vunpack.c.h.b16 %v139
    %v496 = vunpack.c.l.b16 %v140
    %v497 = vunpack.c.h.b16 %v140
    %v498 = vunpack.c.l.b16 %v141
    %v499 = vunpack.c.h.b16 %v141
    %v500 = vunpack.c.l.b16 %v142
    %v501 = vunpack.c.h.b16 %v142
    %v502 = vunpack.c.l.b16 %v143
    %v503 = vunpack.c.h.b16 %v143
    %v504 = vunpack.c.l.b16 %v144
    %v505 = vunpack.c.h.b16 %v144
    %v506 = vunpack.c.l.b16 %v145
    %v507 = vunpack.c.h.b16 %v145
    %v508 = vunpack.c.l.b16 %v146
    %v509 = vunpack.c.h.b16 %v146
    %v510 = vunpack.c.l.b16 %v147
    %v511 = vunpack.c.h.b16 %v147
    %v512 = vunpack.c.l.b16 %v148
    %v513 = vunpack.c.h.b16 %v148
    %v514 = vunpack.c.l.b16 %v149
    %v515 = vunpack.c.h.b16 %v149
    %v516 = vunpack.c.l.b16 %v150
    %v517 = vunpack.c.h.b16 %v150
    %v518 = vunpack.c.l.b16 %v151
    %v519 = vunpack.c.h.b16 %v151
    %v520 = vunpack.c.l.b16 %v152
    %v521 = vunpack.c.h.b16 %v152
    %v522 = vunpack.c.l.b16 %v153
    %v523 = vunpack.c.h.b16 %v153
    %v524 = vunpack.c.l.b16 %v154
    %v525 = vunpack.c.h.b16 %v154
    %v526 = vunpack.c.l.b16 %v155
    %v527 = vunpack.c.h.b16 %v155
    %v528 = vunpack.c.l.b16 %v156
    %v529 = vunpack.c.h.b16 %v156
    %v530 = vunpack.c.l.b16 %v157
    %v531 = vunpack.c.h.b16 %v157
    %v532 = vunpack.c.l.b16 %v158
    %v533 = vunpack.c.h.b16 %v158
    %v534 = vunpack.c.l.b16 %v159
    %v535 = vunpack.c.h.b16 %v159
    %v536 = vunpack.c.l.b16 %v160
    %v537 = vunpack.c.h.b16 %v160
    %v538 = vunpack.c.l.b16 %v161
    %v539 = vunpack.c.h.b16 %v161
    %v540 = vunpack.c.l.b16 %v162
    %v541 = vunpack.c.h.b16 %v162
    %v542 = vunpack.c.l.b16 %v163
    %v543 = vunpack.c.h.b16 %v163
    %v544 = vunpack.c.l.b16 %v164
    %v545 = vunpack.c.h.b16 %v164
    %v546 = vunpack.c.l.b16 %v165
    %v547 = vunpack.c.h.b16 %v165
    %v548 = vunpack.c.l.b16 %v166
    %v549 = vunpack.c.h.b16 %v166
    %v550 = vunpack.c.l.b16 %v167
    %v551 = vunpack.c.h.b16 %v167
    %v552 = vpack.c.b16 %v304, %v296
    %v553 = vpack.c.b16 %v305, %v297
    %v554 = vpack.c.b16 %v306, %v298
    %v555 = vpack.c.b16 %v307, %v299
    %v556 = vpack.c.b16 %v308, %v300
    %v557 = vpack.c.b16 %v309, %v301
    %v558 = vpack.c.b16 %v310, %v302
    %v559 = vpack.c.b16 %v311, %v303
    %v560 = vpack.c.b16 %v320, %v312
    %v561 = vpack.c.b16 %v321, %v313
    %v562 = vpack.c.b16 %v322, %v314
    %v563 = vpack.c.b16 %v323, %v315
    %v564 = vpack.c.b16 %v324, %v316
    %v565 = vpack.c.b16 %v325, %v317
    %v566 = vpack.c.b16 %v326, %v318
    %v567 = vpack.c.b16 %v327, %v319
    %v568 = vpack.c.b16 %v336, %v328
    %v569 = vpack.c.b16 %v337, %v329
    %v570 = vpack.c.b16 %v338, %v330
    %v571 = vpack.c.b16 %v339, %v331
    %v572 = vpack.c.b16 %v340, %v332
    %v573 = vpack.c.b16 %v341, %v333
    %v574 = vpack.c.b16 %v342, %v334
    %v575 = vpack.c.b16 %v343, %v335
    %v576 = vpack.c.b16 %v352, %v344
    %v577 = vpack.c.b16 %v353, %v345
    %v578 = vpack.c.b16 %v354, %v346
    %v579 = vpack.c.b16 %v355, %v347
    %v580 = vpack.c.b16 %v356, %v348
    %v581 = vpack.c.b16 %v357, %v349
    %v582 = vpack.c.b16 %v358, %v350
    %v583 = vpack.c.b16 %v359, %v351
    %v584 = vpack.c.b16 %v368, %v360
    %v585 = vpack.c.b16 %v369, %v361
    %v586 = vpack.c.b16 %v370, %v362
    %v587 = vpack.c.b16 %v371, %v363
    %v588 = vpack.c.b16 %v372, %v364
    %v589 = vpack.c.b16 %v373, %v365
    %v590 = vpack.c.b16 %v374, %v366
    %v591 = vpack.c.b16 %v375, %v367
    %v592 = vpack.c.b16 %v384, %v376
    %v593 = vpack.c.b16 %v385, %v377
    %v594 = vpack.c.b16 %v386, %v378
    %v595 = vpack.c.b16 %v387, %v379
    %v596 = vpack.c.b16 %v388, %v380
    %v597 = vpack.c.b16 %v389, %v381
    %v598 = vpack.c.b16 %v390, %v382
    %v599 = vpack.c.b16 %v391, %v383
    %v600 = vpack.c.b16 %v400, %v392
    %v601 = vpack.c.b16 %v401, %v393
    %v602 = vpack.c.b16 %v402, %v394
    %v603 = vpack.c.b16 %v403, %v395
    %v604 = vpack.c.b16 %v404, %v396
    %v605 = vpack.c.b16 %v405, %v397
    %v606 = vpack.c.b16 %v406, %v398
    %v607 = vpack.c.b16 %v407, %v399
    %v608 = vpack.c.b16 %v416, %v408
    %v609 = vpack.c.b16 %v417, %v409
    %v610 = vpack.c.b16 %v418, %v410
    %v611 = vpack.c.b16 %v419, %v411
    %v612 = vpack.c.b16 %v420, %v412
    %v613 = vpack.c.b16 %v421, %v413
    %v614 = vpack.c.b16 %v422, %v414
    %v615 = vpack.c.b16 %v423, %v415
    %v616 = vpack.c.b16 %v432, %v424
    %v617 = vpack.c.b16 %v433, %v425
    %v618 = vpack.c.b16 %v434, %v426
    %v619 = vpack.c.b16 %v435, %v427
    %v620 = vpack.c.b16 %v436, %v428
    %v621 = vpack.c.b16 %v437, %v429
    %v622 = vpack.c.b16 %v438, %v430
    %v623 = vpack.c.b16 %v439, %v431
    %v624 = vpack.c.b16 %v448, %v440
    %v625 = vpack.c.b16 %v449, %v441
    %v626 = vpack.c.b16 %v450, %v442
    %v627 = vpack.c.b16 %v451, %v443
    %v628 = vpack.c.b16 %v452, %v444
    %v629 = vpack.c.b16 %v453, %v445
    %v630 = vpack.c.b16 %v454, %v446
    %v631 = vpack.c.b16 %v455, %v447
    %v632 = vpack.c.b16 %v464, %v456
    %v633 = vpack.c.b16 %v465, %v457
    %v634 = vpack.c.b16 %v466, %v458
    %v635 = vpack.c.b16 %v467, %v459
    %v636 = vpack.c.b16 %v468, %v460
    %v637 = vpack.c.b16 %v469, %v461
    %v638 = vpack.c.b16 %v470, %v462
    %v639 = vpack.c.b16 %v471, %v463
    %v640 = vpack.c.b16 %v480, %v472
    %v641 = vpack.c.b16 %v481, %v473
    %v642 = vpack.c.b16 %v482, %v474
    %v643 = vpack.c.b16 %v483, %v475
    %v644 = vpack.c.b16 %v484, %v476
    %v645 = vpack.c.b16 %v485, %v477
    %v646 = vpack.c.b16 %v486, %v478
    %v647 = vpack.c.b16 %v487, %v479
    %v648 = vpack.c.b16 %v496, %v488
    %v649 = vpack.c.b16 %v497, %v489
    %v650 = vpack.c.b16 %v498, %v490
    %v651 = vpack.c.b16 %v499, %v491
    %v652 = vpack.c.b16 %v500, %v492
    %v653 = vpack.c.b16 %v501, %v493
    %v654 = vpack.c.b16 %v502, %v494
    %v655 = vpack.c.b16 %v503, %v495
    %v656 = vpack.c.b16 %v512, %v504
    %v657 = vpack.c.b16 %v513, %v505
    %v658 = vpack.c.b16 %v514, %v506
    %v659 = vpack.c.b16 %v515, %v507
    %v660 = vpack.c.b16 %v516, %v508
    %v661 = vpack.c.b16 %v517, %v509
    %v662 = vpack.c.b16 %v518, %v510
    %v663 = vpack.c.b16 %v519, %v511
    %v664 = vpack.c.b16 %v528, %v520
    %v665 = vpack.c.b16 %v529, %v521
    %v666 = vpack.c.b16 %v530, %v522
    %v667 = vpack.c.b16 %v531, %v523
    %v668 = vpack.c.b16 %v532, %v524
    %v669 = vpack.c.b16 %v533, %v525
    %v670 = vpack.c.b16 %v534, %v526
    %v671 = vpack.c.b16 %v535, %v527
    %v672 = vpack.c.b16 %v544, %v536
    %v673 = vpack.c.b16 %v545, %v537
    %v674 = vpack.c.b16 %v546, %v538
    %v675 = vpack.c.b16 %v547, %v539
    %v676 = vpack.c.b16 %v548, %v540
    %v677 = vpack.c.b16 %v549, %v541
    %v678 = vpack.c.b16 %v550, %v542
    %v679 = vpack.c.b16 %v551, %v543
    %808 = vmatprep.subr.bf16.mxu0 %v609
    %809 = vmatpush1.bf16.msra.mxu0 %v608
    %810 = vmatprep.subr.bf16.mxu0 %v601
    %811 = vmatpush1.bf16.msra.mxu0 %v600
    %812 = vmatprep.subr.bf16.mxu0 %v593
    %813 = vmatpush1.bf16.msra.mxu0 %v592
    %814 = vmatprep.subr.bf16.mxu0 %v585
    %815 = vmatpush1.bf16.msra.mxu0 %v584
    %816 = vmatprep.subr.bf16.mxu0 %v577
    %817 = vmatpush1.bf16.msra.mxu0 %v576
    %818 = vmatprep.subr.bf16.mxu0 %v569
    %819 = vmatpush1.bf16.msra.mxu0 %v568
    %820 = vmatprep.subr.bf16.mxu0 %v561
    %821 = vmatpush1.bf16.msra.mxu0 %v560
    %822 = vmatprep.subr.bf16.mxu0 %v553
    %823 = vmatpush1.bf16.msra.mxu0 %v552
    %824 = vmatprep.subr.bf16.mxu0 %v673
    %825 = vmatpush2.bf16.msra.mxu0 %v672
    %826 = vmatprep.subr.bf16.mxu0 %v665
    %827 = vmatpush2.bf16.msra.mxu0 %v664
    %828 = vmatprep.subr.bf16.mxu0 %v657
    %829 = vmatpush2.bf16.msra.mxu0 %v656
    %830 = vmatprep.subr.bf16.mxu0 %v649
    %831 = vmatpush2.bf16.msra.mxu0 %v648
    %832 = vmatprep.subr.bf16.mxu0 %v641
    %833 = vmatpush2.bf16.msra.mxu0 %v640
    %834 = vmatprep.subr.bf16.mxu0 %v633
    %835 = vmatpush2.bf16.msra.mxu0 %v632
    %836 = vmatprep.subr.bf16.mxu0 %v625
    %837 = vmatpush2.bf16.msra.mxu0 %v624
    %838 = vmatprep.subr.bf16.mxu0 %v617
    %839 = vmatpush2.bf16.msra.mxu0 %v616
    %840 = vmatprep.mubr.f32.mxu0 %v39
    %841 = vmatmul.mubr.f32.gmra.mxu0 %v38
    %v842 = vpop.f32.mrf.mxu0
    %v843 = vadd.f32 0.0, %v842
    %v844 = vpop.f32.mrf.mxu0
    %v845 = vadd.f32 0.0, %v844
    %846 = vdwg.mxu0
    %847 = vmatprep.subr.bf16.mxu0 %v611
    %848 = vmatpush1.bf16.msra.mxu0 %v610
    %849 = vmatprep.subr.bf16.mxu0 %v603
    %850 = vmatpush1.bf16.msra.mxu0 %v602
    %851 = vmatprep.subr.bf16.mxu0 %v595
    %852 = vmatpush1.bf16.msra.mxu0 %v594
    %853 = vmatprep.subr.bf16.mxu0 %v587
    %854 = vmatpush1.bf16.msra.mxu0 %v586
    %855 = vmatprep.subr.bf16.mxu0 %v579
    %856 = vmatpush1.bf16.msra.mxu0 %v578
    %857 = vmatprep.subr.bf16.mxu0 %v571
    %858 = vmatpush1.bf16.msra.mxu0 %v570
    %859 = vmatprep.subr.bf16.mxu0 %v563
    %860 = vmatpush1.bf16.msra.mxu0 %v562
    %861 = vmatprep.subr.bf16.mxu0 %v555
    %862 = vmatpush1.bf16.msra.mxu0 %v554
    %863 = vmatprep.subr.bf16.mxu0 %v675
    %864 = vmatpush2.bf16.msra.mxu0 %v674
    %865 = vmatprep.subr.bf16.mxu0 %v667
    %866 = vmatpush2.bf16.msra.mxu0 %v666
    %867 = vmatprep.subr.bf16.mxu0 %v659
    %868 = vmatpush2.bf16.msra.mxu0 %v658
    %869 = vmatprep.subr.bf16.mxu0 %v651
    %870 = vmatpush2.bf16.msra.mxu0 %v650
    %871 = vmatprep.subr.bf16.mxu0 %v643
    %872 = vmatpush2.bf16.msra.mxu0 %v642
    %873 = vmatprep.subr.bf16.mxu0 %v635
    %874 = vmatpush2.bf16.msra.mxu0 %v634
    %875 = vmatprep.subr.bf16.mxu0 %v627
    %876 = vmatpush2.bf16.msra.mxu0 %v626
    %877 = vmatprep.subr.bf16.mxu0 %v619
    %878 = vmatpush2.bf16.msra.mxu0 %v618
    %879 = vmatprep.mubr.f32.mxu0 %v39
    %880 = vmatmul.mubr.f32.gmra.mxu0 %v38
    %v881 = vpop.f32.mrf.mxu0
    %v882 = vadd.f32 0.0, %v881
    %v883 = vpop.f32.mrf.mxu0
    %v884 = vadd.f32 0.0, %v883
    %885 = vdwg.mxu0
    %886 = vmatprep.subr.bf16.mxu0 %v613
    %887 = vmatpush1.bf16.msra.mxu0 %v612
    %888 = vmatprep.subr.bf16.mxu0 %v605
    %889 = vmatpush1.bf16.msra.mxu0 %v604
    %890 = vmatprep.subr.bf16.mxu0 %v597
    %891 = vmatpush1.bf16.msra.mxu0 %v596
    %892 = vmatprep.subr.bf16.mxu0 %v589
    %893 = vmatpush1.bf16.msra.mxu0 %v588
    %894 = vmatprep.subr.bf16.mxu0 %v581
    %895 = vmatpush1.bf16.msra.mxu0 %v580
    %896 = vmatprep.subr.bf16.mxu0 %v573
    %897 = vmatpush1.bf16.msra.mxu0 %v572
    %898 = vmatprep.subr.bf16.mxu0 %v565
    %899 = vmatpush1.bf16.msra.mxu0 %v564
    %900 = vmatprep.subr.bf16.mxu0 %v557
    %901 = vmatpush1.bf16.msra.mxu0 %v556
    %902 = vmatprep.subr.bf16.mxu0 %v677
    %903 = vmatpush2.bf16.msra.mxu0 %v676
    %904 = vmatprep.subr.bf16.mxu0 %v669
    %905 = vmatpush2.bf16.msra.mxu0 %v668
    %906 = vmatprep.subr.bf16.mxu0 %v661
    %907 = vmatpush2.bf16.msra.mxu0 %v660
    %908 = vmatprep.subr.bf16.mxu0 %v653
    %909 = vmatpush2.bf16.msra.mxu0 %v652
    %910 = vmatprep.subr.bf16.mxu0 %v645
    %911 = vmatpush2.bf16.msra.mxu0 %v644
    %912 = vmatprep.subr.bf16.mxu0 %v637
    %913 = vmatpush2.bf16.msra.mxu0 %v636
    %914 = vmatprep.subr.bf16.mxu0 %v629
    %915 = vmatpush2.bf16.msra.mxu0 %v628
    %916 = vmatprep.subr.bf16.mxu0 %v621
    %917 = vmatpush2.bf16.msra.mxu0 %v620
    %918 = vmatprep.mubr.f32.mxu0 %v39
    %919 = vmatmul.mubr.f32.gmra.mxu0 %v38
    %v920 = vpop.f32.mrf.mxu0
    %v921 = vadd.f32 0.0, %v920
    %v922 = vpop.f32.mrf.mxu0
    %v923 = vadd.f32 0.0, %v922
    %924 = vdwg.mxu0
    %925 = vmatprep.subr.bf16.mxu0 %v615
    %926 = vmatpush1.bf16.msra.mxu0 %v614
    %927 = vmatprep.subr.bf16.mxu0 %v607
    %928 = vmatpush1.bf16.msra.mxu0 %v606
    %929 = vmatprep.subr.bf16.mxu0 %v599
    %930 = vmatpush1.bf16.msra.mxu0 %v598
    %931 = vmatprep.subr.bf16.mxu0 %v591
    %932 = vmatpush1.bf16.msra.mxu0 %v590
    %933 = vmatprep.subr.bf16.mxu0 %v583
    %934 = vmatpush1.bf16.msra.mxu0 %v582
    %935 = vmatprep.subr.bf16.mxu0 %v575
    %936 = vmatpush1.bf16.msra.mxu0 %v574
    %937 = vmatprep.subr.bf16.mxu0 %v567
    %938 = vmatpush1.bf16.msra.mxu0 %v566
    %939 = vmatprep.subr.bf16.mxu0 %v559
    %940 = vmatpush1.bf16.msra.mxu0 %v558
    %941 = vmatprep.subr.bf16.mxu0 %v679
    %942 = vmatpush2.bf16.msra.mxu0 %v678
    %943 = vmatprep.subr.bf16.mxu0 %v671
    %944 = vmatpush2.bf16.msra.mxu0 %v670
    %945 = vmatprep.subr.bf16.mxu0 %v663
    %946 = vmatpush2.bf16.msra.mxu0 %v662
    %947 = vmatprep.subr.bf16.mxu0 %v655
    %948 = vmatpush2.bf16.msra.mxu0 %v654
    %949 = vmatprep.subr.bf16.mxu0 %v647
    %950 = vmatpush2.bf16.msra.mxu0 %v646
    %951 = vmatprep.subr.bf16.mxu0 %v639
    %952 = vmatpush2.bf16.msra.mxu0 %v638
    %953 = vmatprep.subr.bf16.mxu0 %v631
    %954 = vmatpush2.bf16.msra.mxu0 %v630
    %955 = vmatprep.subr.bf16.mxu0 %v623
    %956 = vmatpush2.bf16.msra.mxu0 %v622
    %957 = vmatprep.mubr.f32.mxu0 %v39
    %958 = vmatmul.mubr.f32.gmra.mxu0 %v38
    %v959 = vpop.f32.mrf.mxu0
    %v960 = vadd.f32 0.0, %v959
    %v961 = vpop.f32.mrf.mxu0
    %v962 = vadd.f32 0.0, %v961
    %963 = vdwg.mxu0
    %964 = vst [vmem:[#allocation7] sm:$0xff] %v843
    %965 = vst [vmem:[#allocation7 + $0x8] sm:$0xff] %v845
    %966 = vst [vmem:[#allocation7 + $0x10] sm:$0xff] %v882
    %967 = vst [vmem:[#allocation7 + $0x18] sm:$0xff] %v884
    %968 = vst [vmem:[#allocation7 + $0x20] sm:$0xff] %v921
    %969 = vst [vmem:[#allocation7 + $0x28] sm:$0xff] %v923
    %970 = vst [vmem:[#allocation7 + $0x30] sm:$0xff] %v960
    %971 = vst [vmem:[#allocation7 + $0x38] sm:$0xff] %v962
    // Predicated region
    $region18: #{tpu_custom_call.1} parent=1 // pred_check
      _
    $region19: #{tpu_custom_call.1} parent=1 // pred_check_branch
      %973 = sbr.rel (0) target = $region21
    $region20: #{tpu_custom_call.1} parent=1 // pred_region
      %s975 = ssub.s32 1024, 1024
      %976 = vsyncadd [#allocation4], %s975
      %s978 = sshll.u32 [#allocation7], 4
      %s979 = int_to_ptr.vmem [resolvable:$true] %s978
      %981 = dma.vmem_to_hbm [thread:$0]  %s979, 1024, %s2, [#allocation4]
    $region21: #{tpu_custom_call.1} parent=1 // pred_fallthru
      _
    // Predicated region
    $region22: #{tpu_custom_call.1} parent=1 // pred_check
      _
    $region23: #{tpu_custom_call.1} parent=1 // pred_check_branch
      %983 = sbr.rel (0) target = $region25
    $region24: #{tpu_custom_call.1} parent=1 // pred_region
      %984 = dma.done [#allocation4], 1024
    $region25: #{tpu_custom_call.1} parent=1 // pred_fallthru
      _
    %985 = vsyncpa [#allocation3], 1
    %986 = vsyncpa [#allocation6], 1
    %987 = vsyncpa [#allocation4], 1

</llo_original>
